<compile_context>
chip_gen: v7x
topology: tpu7x:2x2x1
jax: 0.10.0
libtpu: 0.0.40
codegen_flags: <defaults>
</compile_context>

<pallas_src>
import jax
import jax.numpy as jnp
from jax.experimental import pallas as pl
from jax.experimental.pallas import tpu as pltpu


def get_mixer_mask(n, dtype=jnp.float32, band_width=-1):
    """Mixer mask over Fourier mode indices (square, size n x n)."""
    if band_width == -1:
        return jnp.ones((n, n), dtype=dtype)
    # TODO(synk): exact banded-mask semantics of the original get_mixer_mask are
    # not specified in the provided source; using signed-frequency distance band.
    idx = jnp.arange(n)
    freq = jnp.where(idx <= n // 2, idx, idx - n)
    d = jnp.abs(freq[:, None] - freq[None, :])
    return (d <= band_width).astype(dtype)


def _mixer_kernel(a1_ref, a2blk_ref, t_ref, o_ref):
    # a1_ref:    (1, M, M)    (eW1 * mask) for this channel
    # a2blk_ref: (1, BM, BM)  block-diag kron(I_B, (eW2*mask)^T) for this channel
    # t_ref:     (1, M, BM)   gathered spectrum, all batches, batch on lanes
    # o_ref:     (1, M, BM)
    t = t_ref[0]
    abs_t = jnp.abs(t)
    unit = t * pl.reciprocal(abs_t + 1e-5, approx=False)  # EUP, not VPU divide
    y = jnp.dot(a1_ref[0], abs_t, preferred_element_type=jnp.float32)   # row mix
    z = jnp.dot(y, a2blk_ref[0], preferred_element_type=jnp.float32)    # col mix
    o_ref[0] = (z * unit).astype(o_ref.dtype)


def _run_mixer(temp, A1, A2):
    """temp: (B, C, M, M); A1/A2: (C, M, M), already multiplied by the mixer mask."""
    B, C, M1, M2 = temp.shape
    BM = B * M2

    # Batch onto the lane axis (wrapper-side layout plumbing, not compute).
    t_lane = jnp.transpose(temp, (1, 2, 0, 3)).reshape(C, M1, BM)

    # Block-diagonal kron(I_B, A2^T): the column mix becomes one lane-dense
    # matmul with no in-kernel transpose.  (Scales as B^2 in memory; fine for
    # small B — for large B switch to a batched einsum inside the kernel.)
    eye_b = jnp.eye(B, dtype=A2.dtype)
    a2blk = jnp.einsum('bd,cjk->cbkdj', eye_b, A2).reshape(C, BM, BM)

    out = pl.pallas_call(
        _mixer_kernel,
        out_shape=jax.ShapeDtypeStruct((C, M1, BM), temp.dtype),
        grid_spec=pltpu.PrefetchScalarGridSpec(
            num_scalar_prefetch=0,
            grid=(C,),
            in_specs=[
                pl.BlockSpec((1, M1, M2), lambda c: (c, 0, 0)),
                pl.BlockSpec((1, BM, BM), lambda c: (c, 0, 0)),
                pl.BlockSpec((1, M1, BM), lambda c: (c, 0, 0)),
            ],
            out_specs=pl.BlockSpec((1, M1, BM), lambda c: (c, 0, 0)),
        ),
        compiler_params=pltpu.CompilerParams(
            dimension_semantics=("parallel",)),
    )(A1, a2blk, t_lane)

    return jnp.transpose(out.reshape(C, M1, B, M2), (2, 0, 1, 3))


def spectral_mixer_2d_shifteq(x, W1, W2, bias1, in_modes1, in_modes2,
                              mode_size, mixer_band=-1):
    """Forward pass mirroring SpectralMixer_2D_shifteq.forward (x is NCHW)."""
    B, C, H, W = x.shape
    h1 = min(mode_size // 2, in_modes1 // 2)
    h2 = min(mode_size // 2, in_modes2 // 2)
    s = in_modes1 % 2
    M1 = 2 * h1 + s
    M2 = 2 * h2 + s
    if M1 != M2:
        # The module's square mask and its matmuls implicitly require M1 == M2.
        raise ValueError(f"SpectralMixer_2D_shifteq requires M1 == M2, got {M1} != {M2}")

    def gather4(src, rows, cols):
        # Gather the four Fourier corners of `src` into an (..., M1, M2) array
        # with a concatenation tree (no zeros + dynamic-update-slices).
        top = jnp.concatenate(
            [src[..., :h1 + s, :h2 + s], src[..., :h1 + s, cols - h2:]], axis=-1)
        bot = jnp.concatenate(
            [src[..., rows - h1:, :h2 + s], src[..., rows - h1:, cols - h2:]], axis=-1)
        return jnp.concatenate([top, bot], axis=-2)

    temp = gather4(x, H, W)                         # (B, C, M1, M2)
    eW1 = gather4(W1, mode_size, mode_size)         # (C, M1, M2)
    eW2 = gather4(W2, mode_size, mode_size)
    _ebias1 = gather4(bias1, mode_size, mode_size)  # built but unused (matches PyTorch)

    # Hoist the (batch-invariant) mask multiply out of the kernel.
    mask = get_mixer_mask(M1, dtype=W1.dtype, band_width=mixer_band)
    A1 = eW1 * mask[None]
    A2 = eW2 * mask[None]

    out = _run_mixer(temp, A1, A2)                  # (B, C, M1, M2)

    # Scatter the mixed corners back into x with a single concatenation tree
    # (one logical pass over x instead of 4 dynamic-update-slice copies).
    top = jnp.concatenate([out[..., :h1 + s, :h2 + s],
                           x[..., :h1 + s, h2 + s:W - h2],
                           out[..., :h1 + s, M2 - h2:]], axis=-1)
    bot = jnp.concatenate([out[..., M1 - h1:, :h2 + s],
                           x[..., H - h1:, h2 + s:W - h2],
                           out[..., M1 - h1:, M2 - h2:]], axis=-1)
    mid = x[..., h1 + s:H - h1, :]
    return jnp.concatenate([top, mid, bot], axis=-2)


def _reference(x, W1, W2, bias1, in_modes1, in_modes2, mode_size, mixer_band=-1):
    """Pure-JAX reference (direct transcription of the PyTorch forward)."""
    B, C, H, W = x.shape
    h1 = min(mode_size // 2, in_modes1 // 2)
    h2 = min(mode_size // 2, in_modes2 // 2)
    s = in_modes1 % 2
    M1, M2 = 2 * h1 + s, 2 * h2 + s

    temp = jnp.zeros((B, C, M1, M2), x.dtype)
    temp = temp.at[:, :, :h1 + s, :h2 + s].set(x[:, :, :h1 + s, :h2 + s])
    temp = temp.at[:, :, M1 - h1:, :h2 + s].set(x[:, :, H - h1:, :h2 + s])
    temp = temp.at[:, :, :h1 + s, M2 - h2:].set(x[:, :, :h1 + s, W - h2:])
    temp = temp.at[:, :, M1 - h1:, M2 - h2:].set(x[:, :, H - h1:, W - h2:])

    def gw(src):
        o = jnp.zeros((C, M1, M2), src.dtype)
        o = o.at[:, :h1 + s, :h2 + s].set(src[:, :h1 + s, :h2 + s])
        o = o.at[:, M1 - h1:, :h2 + s].set(src[:, mode_size - h1:, :h2 + s])
        o = o.at[:, :h1 + s, M2 - h2:].set(src[:, :h1 + s, mode_size - h2:])
        o = o.at[:, M1 - h1:, M2 - h2:].set(src[:, mode_size - h1:, mode_size - h2:])
        return o

    eW1, eW2 = gw(W1), gw(W2)
    mask = get_mixer_mask(M1, dtype=W1.dtype, band_width=mixer_band)

    unit = temp / (jnp.abs(temp) + 1e-5)
    t = jnp.abs(temp)
    t = jnp.einsum('cik,bckj->bcij', eW1 * mask[None], t)
    t = jnp.einsum('bcik,cjk->bcij', t, eW2 * mask[None])
    t = t * unit

    x = x.at[:, :, :h1 + s, :h2 + s].set(t[:, :, :h1 + s, :h2 + s])
    x = x.at[:, :, H - h1:, :h2 + s].set(t[:, :, M1 - h1:, :h2 + s])
    x = x.at[:, :, :h1 + s, W - h2:].set(t[:, :, :h1 + s, M2 - h2:])
    x = x.at[:, :, H - h1:, W - h2:].set(t[:, :, M1 - h1:, M2 - h2:])
    return x


if __name__ == "__main__":
    B, C = 2, 4
    H = W = 16          # spatial (Fourier-coefficient) size of x
    mode_size = 12      # module's max number of modes
    in_modes1 = in_modes2 = 16

    key = jax.random.PRNGKey(0)
    kx, k1, k2, k3 = jax.random.split(key, 4)
    scale = (2.0 / mode_size) ** 0.5
    x = jax.random.normal(kx, (B, C, H, W), dtype=jnp.float32)
    W1 = scale * jax.random.normal(k1, (C, mode_size, mode_size), dtype=jnp.float32)
    W2 = scale * jax.random.normal(k2, (C, mode_size, mode_size), dtype=jnp.float32)
    bias1 = scale * jax.random.normal(k3, (C, mode_size, mode_size), dtype=jnp.float32)

    out = spectral_mixer_2d_shifteq(x, W1, W2, bias1, in_modes1, in_modes2,
                                    mode_size, mixer_band=-1)
    out = jax.block_until_ready(out)

    ref = _reference(x, W1, W2, bias1, in_modes1, in_modes2, mode_size, -1)
    assert out.shape == x.shape and out.dtype == x.dtype
    assert jnp.allclose(out, ref, atol=1e-4, rtol=1e-4), "mismatch vs reference"
    print("KERNEL_OK")
</pallas_src>

<mosaic_0001>
module attributes {stable_mosaic.version = 11 : i64} {
  func.func @_mixer_kernel(%arg0: i32, %arg1: memref<1x12x12xf32, #tpu.memory_space<vmem>>, %arg2: memref<1x24x24xf32, #tpu.memory_space<vmem>>, %arg3: memref<1x12x24xf32, #tpu.memory_space<vmem>>, %arg4: memref<1x12x24xf32, #tpu.memory_space<vmem>>) attributes {dimension_semantics = [#tpu.dimension_semantics<parallel>], iteration_bounds = array<i64: 4>, scalar_prefetch = 0 : i64, scratch_operands = 0 : i64, tpu.core_type = #tpu.core_type<tc>, window_params = [{transform_indices = @transform_0, window_bounds = array<i64: 1, 12, 12>}, {transform_indices = @transform_1, window_bounds = array<i64: 1, 24, 24>}, {transform_indices = @transform_2, window_bounds = array<i64: 1, 12, 24>}, {transform_indices = @transform_3, window_bounds = array<i64: 1, 12, 24>}]} {
    %c0 = arith.constant 0 : index
    %c0_0 = arith.constant 0 : index
    %c0_1 = arith.constant 0 : index
    %0 = vector.load %arg3[%c0, %c0_0, %c0_1] : memref<1x12x24xf32, #tpu.memory_space<vmem>>, vector<1x12x24xf32>
    %1 = vector.shape_cast %0 : vector<1x12x24xf32> to vector<12x24xf32>
    %2 = math.absf %1 : vector<12x24xf32>
    %cst = arith.constant 9.99999974E-6 : f32
    %3 = vector.broadcast %cst : f32 to vector<12x24xf32>
    %4 = arith.addf %2, %3 : vector<12x24xf32>
    %5 = tpu.reciprocal %4 : vector<12x24xf32> -> vector<12x24xf32>
    %6 = arith.mulf %1, %5 : vector<12x24xf32>
    %c0_2 = arith.constant 0 : index
    %c0_3 = arith.constant 0 : index
    %c0_4 = arith.constant 0 : index
    %7 = vector.load %arg1[%c0_2, %c0_3, %c0_4] : memref<1x12x12xf32, #tpu.memory_space<vmem>>, vector<1x12x12xf32>
    %8 = vector.shape_cast %7 : vector<1x12x12xf32> to vector<12x12xf32>
    %cst_5 = arith.constant dense<0.000000e+00> : vector<12x24xf32>
    %9 = tpu.matmul %8, %2, %cst_5 {dimension_numbers = #tpu.dot_dimension_numbers<[1], [0], [0], [1], [0, 0, 1, 1], [], []>} : vector<12x12xf32>, vector<12x24xf32>, vector<12x24xf32> -> vector<12x24xf32>
    %c0_6 = arith.constant 0 : index
    %c0_7 = arith.constant 0 : index
    %c0_8 = arith.constant 0 : index
    %10 = vector.load %arg2[%c0_6, %c0_7, %c0_8] : memref<1x24x24xf32, #tpu.memory_space<vmem>>, vector<1x24x24xf32>
    %11 = vector.shape_cast %10 : vector<1x24x24xf32> to vector<24x24xf32>
    %cst_9 = arith.constant dense<0.000000e+00> : vector<12x24xf32>
    %12 = tpu.matmul %9, %11, %cst_9 {dimension_numbers = #tpu.dot_dimension_numbers<[1], [0], [0], [1], [0, 0, 1, 1], [], []>} : vector<12x24xf32>, vector<24x24xf32>, vector<12x24xf32> -> vector<12x24xf32>
    %13 = arith.mulf %12, %6 : vector<12x24xf32>
    %c0_10 = arith.constant 0 : index
    %c0_11 = arith.constant 0 : index
    %c0_12 = arith.constant 0 : index
    %14 = vector.load %arg4[%c0_10, %c0_11, %c0_12] : memref<1x12x24xf32, #tpu.memory_space<vmem>>, vector<1x12x24xf32>
    %15 = vector.shape_cast %14 : vector<1x12x24xf32> to vector<12x24xf32>
    %16 = vector.shape_cast %13 : vector<12x24xf32> to vector<1x12x24xf32>
    tpu.vector_store %arg4[%c0_10, %c0_11, %c0_12], %16 {strides = array<i32>} : memref<1x12x24xf32, #tpu.memory_space<vmem>>, vector<1x12x24xf32>,
    return
  }
  func.func @transform_0(%arg0: i32) -> (i32, i32, i32) {
    %c0_i32 = arith.constant 0 : i32
    %c0_i32_0 = arith.constant 0 : i32
    %c0_i32_1 = arith.constant 0 : i32
    return %arg0, %c0_i32, %c0_i32_0 : i32, i32, i32
  }
  func.func @transform_1(%arg0: i32) -> (i32, i32, i32) {
    %c0_i32 = arith.constant 0 : i32
    %c0_i32_0 = arith.constant 0 : i32
    %c0_i32_1 = arith.constant 0 : i32
    return %arg0, %c0_i32, %c0_i32_0 : i32, i32, i32
  }
  func.func @transform_2(%arg0: i32) -> (i32, i32, i32) {
    %c0_i32 = arith.constant 0 : i32
    %c0_i32_0 = arith.constant 0 : i32
    %c0_i32_1 = arith.constant 0 : i32
    return %arg0, %c0_i32, %c0_i32_0 : i32, i32, i32
  }
  func.func @transform_3(%arg0: i32) -> (i32, i32, i32) {
    %c0_i32 = arith.constant 0 : i32
    %c0_i32_0 = arith.constant 0 : i32
    %c0_i32_1 = arith.constant 0 : i32
    return %arg0, %c0_i32, %c0_i32_0 : i32, i32, i32
  }
}

</mosaic_0001>

<llo_original>
// kernel: tpu_custom_call.1
$region0: #{tpu_custom_call.1}
  #allocation0 [shape = 'u32[]', space=smem, size = 0x4, offset = 0x4, fixed_abs, tag = 'smem constant byte address 0x4 - core index']
  #allocation1 [shape = 'u32[144,128]{1,0:T(1,128)}', space=vmem, size = 0x12000, scoped, tag = 'internal scratch']
  %s0 = inlined_call_operand.vmem [shape: f32[4,12,12], index: 0, kind: input, shape index: {}]
  %s1 = inlined_call_operand.vmem [shape: f32[4,24,24], index: 1, kind: input, shape index: {}]
  %s2 = inlined_call_operand.vmem [shape: f32[4,12,24], index: 2, kind: input, shape index: {}]
  %s3 = inlined_call_operand.vmem [shape: f32[4,12,24], index: 3, kind: output, shape index: {}]
  %s4 = sld [smem:[#allocation0]]
  $region45: #{tpu_custom_call.1} parent=0
    _
  %s6 = ssub.s32 1, %s4
  %s7 = scalar_select 0, %s6, %s4
  loop: start=0, step=1, limit=6
  $region2: #{tpu_custom_call.1} parent=0 // loop_pre_header
    _
  $region3: #{tpu_custom_call.1} parent=0 // loop_header
    %s9 = sphi 0, %s13
    %p10 = scmp.ge.s32.totalorder %s9, 6
    %s19 = sphi 0, %s21
    %s22 = sphi 0, %s19
    %s23 = sphi 0, %s22
    %s39 = sphi 0, %s23
    %s45 = sphi 0, %s47
    %s48 = sphi 0, %s45
    %s49 = sphi 0, %s48
    %s65 = sphi 0, %s49
    %s71 = sphi 0, %s73
    %s74 = sphi 0, %s71
    %s75 = sphi 0, %s74
    %s91 = sphi 0, %s75
    %s97 = sphi 0, %s99
    %s100 = sphi 0, %s97
    %s101 = sphi 0, %s100
    %s117 = sphi 0, %s101
  $region4: #{tpu_custom_call.1} parent=0 // loop_header_branch
    %12 = sbr.rel (%p10) target = $region8
  $region5: #{tpu_custom_call.1} parent=0 // loop_body
    %s14 = ssub.s32 %s9, 1
    %s15 = ssub.s32 %s9, 2
    %s16 = sadd.s32 %s9, 1
    %s17 = ssub.s32 %s9, %s16
    %p18 = scmp.eq.s32.totalorder %s17, 0
    %s20 = sadd.s32 %s19, 1
    %s21 = scalar_select %p18, %s19, %s20
    %p24 = pneg %p18
    %p25 = scmp.eq.s32.totalorder %s9, 3
    %p26 = por %p24, %p25
    %p27 = scmp.ne.s32.totalorder %s19, %s22
    %p28 = scmp.eq.s32.totalorder %s9, 0
    %p29 = por %p27, %p28
    %p30 = scmp.ne.s32.totalorder %s19, %s22
    %p31 = scmp.eq.s32.totalorder %s14, 3
    %p32 = por %p30, %p31
    %p33 = scmp.ne.s32.totalorder %s22, %s23
    %p34 = scmp.eq.s32.totalorder %s14, 0
    %p35 = por %p33, %p34
    %p36 = scmp.ne.s32.totalorder %s22, %s23
    %p37 = scmp.eq.s32.totalorder %s15, 3
    %p38 = por %p36, %p37
    %p40 = scmp.ne.s32.totalorder %s23, %s39
    %p41 = scmp.eq.s32.totalorder %s15, 0
    %p42 = por %p40, %p41
    %s43 = ssub.s32 %s9, %s16
    %p44 = scmp.eq.s32.totalorder %s43, 0
    %s46 = sadd.s32 %s45, 1
    %s47 = scalar_select %p44, %s45, %s46
    %p50 = pneg %p44
    %p51 = scmp.eq.s32.totalorder %s9, 3
    %p52 = por %p50, %p51
    %p53 = scmp.ne.s32.totalorder %s45, %s48
    %p54 = scmp.eq.s32.totalorder %s9, 0
    %p55 = por %p53, %p54
    %p56 = scmp.ne.s32.totalorder %s45, %s48
    %p57 = scmp.eq.s32.totalorder %s14, 3
    %p58 = por %p56, %p57
    %p59 = scmp.ne.s32.totalorder %s48, %s49
    %p60 = scmp.eq.s32.totalorder %s14, 0
    %p61 = por %p59, %p60
    %p62 = scmp.ne.s32.totalorder %s48, %s49
    %p63 = scmp.eq.s32.totalorder %s15, 3
    %p64 = por %p62, %p63
    %p66 = scmp.ne.s32.totalorder %s49, %s65
    %p67 = scmp.eq.s32.totalorder %s15, 0
    %p68 = por %p66, %p67
    %s69 = ssub.s32 %s9, %s16
    %p70 = scmp.eq.s32.totalorder %s69, 0
    %s72 = sadd.s32 %s71, 1
    %s73 = scalar_select %p70, %s71, %s72
    %p76 = pneg %p70
    %p77 = scmp.eq.s32.totalorder %s9, 3
    %p78 = por %p76, %p77
    %p79 = scmp.ne.s32.totalorder %s71, %s74
    %p80 = scmp.eq.s32.totalorder %s9, 0
    %p81 = por %p79, %p80
    %p82 = scmp.ne.s32.totalorder %s71, %s74
    %p83 = scmp.eq.s32.totalorder %s14, 3
    %p84 = por %p82, %p83
    %p85 = scmp.ne.s32.totalorder %s74, %s75
    %p86 = scmp.eq.s32.totalorder %s14, 0
    %p87 = por %p85, %p86
    %p88 = scmp.ne.s32.totalorder %s74, %s75
    %p89 = scmp.eq.s32.totalorder %s15, 3
    %p90 = por %p88, %p89
    %p92 = scmp.ne.s32.totalorder %s75, %s91
    %p93 = scmp.eq.s32.totalorder %s15, 0
    %p94 = por %p92, %p93
    %s95 = ssub.s32 %s9, %s16
    %p96 = scmp.eq.s32.totalorder %s95, 0
    %s98 = sadd.s32 %s97, 1
    %s99 = scalar_select %p96, %s97, %s98
    %p102 = pneg %p96
    %p103 = scmp.eq.s32.totalorder %s9, 3
    %p104 = por %p102, %p103
    %p105 = scmp.ne.s32.totalorder %s97, %s100
    %p106 = scmp.eq.s32.totalorder %s9, 0
    %p107 = por %p105, %p106
    %p108 = scmp.ne.s32.totalorder %s97, %s100
    %p109 = scmp.eq.s32.totalorder %s14, 3
    %p110 = por %p108, %p109
    %p111 = scmp.ne.s32.totalorder %s100, %s101
    %p112 = scmp.eq.s32.totalorder %s14, 0
    %p113 = por %p111, %p112
    %p114 = scmp.ne.s32.totalorder %s100, %s101
    %p115 = scmp.eq.s32.totalorder %s15, 3
    %p116 = por %p114, %p115
    %p118 = scmp.ne.s32.totalorder %s101, %s117
    %p119 = scmp.eq.s32.totalorder %s15, 0
    %p120 = por %p118, %p119
    %p121 = scmp.le.s32.totalorder 1, %s9
    %p122 = scmp.lt.s32.totalorder %s9, 5
    %p123 = pnand %p121, %p122
    %p124 = pneg %p123
    // Predicated region
    $region9: #{tpu_custom_call.1} parent=5 // pred_check
      _
    $region10: #{tpu_custom_call.1} parent=5 // pred_check_branch
      %126 = sbr.rel (%p123) target = $region12
    $region11: #{tpu_custom_call.1} parent=5 // pred_region
      %s127 = ssub.s32 %s9, 1
    $region12: #{tpu_custom_call.1} parent=5 // pred_fallthru
      _
    %p128 = scmp.lt.s32.totalorder %s9, 4
    // Predicated region
    $region13: #{tpu_custom_call.1} parent=5 // pred_check
      %p129 = pneg %p128
    $region14: #{tpu_custom_call.1} parent=5 // pred_check_branch
      %131 = sbr.rel (%p129) target = $region16
    $region15: #{tpu_custom_call.1} parent=5 // pred_region
      // Predicated region
      $region17: #{tpu_custom_call.1} parent=15 // pred_check
        %p132 = pneg %p29
      $region18: #{tpu_custom_call.1} parent=15 // pred_check_branch
        %134 = sbr.rel (%p132) target = $region20
      $region19: #{tpu_custom_call.1} parent=15 // pred_region
        %p135 = scmp.lt.s32.totalorder %s9, 3
        %s136 = scalar_select %p135, %s9, 3
        %s137 = smul.addr %s136, 2
        %s138 = smul.addr %s137, 8
        %s139 = scalar_lea.vmem %s0, %s138
      $region20: #{tpu_custom_call.1} parent=15 // pred_fallthru
        _
      // Predicated region
      $region21: #{tpu_custom_call.1} parent=15 // pred_check
        %p140 = pneg %p55
      $region22: #{tpu_custom_call.1} parent=15 // pred_check_branch
        %142 = sbr.rel (%p140) target = $region24
      $region23: #{tpu_custom_call.1} parent=15 // pred_region
        %p143 = scmp.lt.s32.totalorder %s9, 3
        %s144 = scalar_select %p143, %s9, 3
        %s145 = smul.addr %s144, 3
        %s146 = smul.addr %s145, 8
        %s147 = scalar_lea.vmem %s1, %s146
      $region24: #{tpu_custom_call.1} parent=15 // pred_fallthru
        _
      // Predicated region
      $region25: #{tpu_custom_call.1} parent=15 // pred_check
        %p148 = pneg %p81
      $region26: #{tpu_custom_call.1} parent=15 // pred_check_branch
        %150 = sbr.rel (%p148) target = $region28
      $region27: #{tpu_custom_call.1} parent=15 // pred_region
        %p151 = scmp.lt.s32.totalorder %s9, 3
        %s152 = scalar_select %p151, %s9, 3
        %s153 = smul.addr %s152, 2
        %s154 = smul.addr %s153, 8
        %s155 = scalar_lea.vmem %s2, %s154
      $region28: #{tpu_custom_call.1} parent=15 // pred_fallthru
        _
    $region16: #{tpu_custom_call.1} parent=5 // pred_fallthru
      _
    %p156 = scmp.le.s32.totalorder 1, %s9
    %p157 = scmp.lt.s32.totalorder %s9, 5
    %p158 = pnand %p156, %p157
    %p159 = pneg %p158
    // Predicated region
    $region29: #{tpu_custom_call.1} parent=5 // pred_check
      _
    $region30: #{tpu_custom_call.1} parent=5 // pred_check_branch
      %161 = sbr.rel (%p158) target = $region32
    $region31: #{tpu_custom_call.1} parent=5 // pred_region
      %s162 = ssub.s32 %s9, 1
      %p163 = scmp.lt.s32.totalorder %s14, 3
      %s164 = scalar_select %p163, %s14, 3
      %s165 = smul.addr %s164, 2
      %s166 = smul.addr %s165, 8
      %s167 = scalar_lea.vmem %s0, %s166
      %p168 = pneg %p35
      %p169 = pneg %p32
      %p170 = scmp.lt.s32.totalorder %s14, 3
      %s171 = scalar_select %p170, %s14, 3
      %s172 = smul.addr %s171, 3
      %s173 = smul.addr %s172, 8
      %s174 = scalar_lea.vmem %s1, %s173
      %p175 = pneg %p61
      %p176 = pneg %p58
      %p177 = scmp.lt.s32.totalorder %s14, 3
      %s178 = scalar_select %p177, %s14, 3
      %s179 = smul.addr %s178, 2
      %s180 = smul.addr %s179, 8
      %s181 = scalar_lea.vmem %s2, %s180
      %p182 = pneg %p87
      %p183 = pneg %p84
      %p184 = pneg %p113
      %p185 = pneg %p110
      %p186 = scmp.lt.s32.totalorder %s14, 3
      %s187 = scalar_select %p186, %s14, 3
      %s188 = smul.addr %s187, 2
      %s189 = smul.addr %s188, 8
      %s190 = scalar_lea.vmem %s3, %s189
      %p191 = scmp.lt.s32.totalorder %s14, 3
      %s192 = scalar_select %p191, %s14, 3
      %s193 = smul.addr %s192, 2
      %s194 = smul.addr %s193, 8
      %s195 = scalar_lea.vmem %s0, %s194
      %p196 = scmp.lt.s32.totalorder %s14, 3
      %s197 = scalar_select %p196, %s14, 3
      %s198 = smul.addr %s197, 3
      %s199 = smul.addr %s198, 8
      %s200 = scalar_lea.vmem %s1, %s199
      %p201 = scmp.lt.s32.totalorder %s14, 3
      %s202 = scalar_select %p201, %s14, 3
      %s203 = smul.addr %s202, 2
      %s204 = smul.addr %s203, 8
      %s205 = scalar_lea.vmem %s2, %s204
      %p206 = scmp.lt.s32.totalorder %s14, 3
      %s207 = scalar_select %p206, %s14, 3
      %s208 = smul.addr %s207, 2
      %s209 = smul.addr %s208, 8
      %s210 = scalar_lea.vmem %s3, %s209
      %v211 = vld [vmem:[%s205] sm:$0xff]
      %v212 = vld [vmem:[%s205 + $0x8] sm:$0xf]
      %v213 = vand.u32 2147483647, %v211
      %v214 = vand.u32 2147483647, %v212
      %v215 = vadd.f32 %v213, 1e-05
      %v216 = vadd.f32 %v214, 1e-05
      %v217 = vrcp.pop %v215
      %v218 = vrcp.pop %v216
      %v219 = vmul.f32 %v211, %v217
      %v220 = vmul.f32 %v212, %v218
      %v221 = vld [vmem:[%s195] sm:$0xff]
      %v222 = vld [vmem:[%s195 + $0x8] sm:$0xf]
      %vm223 = vcmask 97280
      %v225 = vsel %vm223, %v221, 0
      %v228 = vsel %vm223, %v222, 0
      %vm230 = vcmask 1043456
      %v232 = vsel %vm230, %v214, 0
      %234 = vmatprep.subr.mxu0 0.0
      %235 = vmatpush1.msra.mxu0 %v213
      %236 = vmatprep.subr.mxu0 0.0
      %237 = vmatpush1.msra.mxu0 %v232
      %238 = vmatprep.subr.mxu0 0.0
      %239 = vmatpush1.msra.mxu0 0.0
      %240 = vmatprep.subr.mxu0 0.0
      %241 = vmatpush1.msra.mxu0 0.0
      %242 = vmatprep.subr.mxu0 0.0
      %243 = vmatpush1.msra.mxu0 0.0
      %244 = vmatprep.subr.mxu0 0.0
      %245 = vmatpush1.msra.mxu0 0.0
      %246 = vmatprep.subr.mxu0 0.0
      %247 = vmatpush1.msra.mxu0 0.0
      %248 = vmatprep.subr.mxu0 0.0
      %249 = vmatpush1.msra.mxu0 0.0
      %250 = vmatprep.subr.mxu0 0.0
      %251 = vmatpush1.msra.mxu0 0.0
      %252 = vmatprep.subr.mxu0 0.0
      %253 = vmatpush1.msra.mxu0 0.0
      %254 = vmatprep.subr.mxu0 0.0
      %255 = vmatpush1.msra.mxu0 0.0
      %256 = vmatprep.subr.mxu0 0.0
      %257 = vmatpush1.msra.mxu0 0.0
      %258 = vmatprep.subr.mxu0 0.0
      %259 = vmatpush1.msra.mxu0 0.0
      %260 = vmatprep.subr.mxu0 0.0
      %261 = vmatpush1.msra.mxu0 0.0
      %262 = vmatprep.subr.mxu0 0.0
      %263 = vmatpush1.msra.mxu0 0.0
      %264 = vmatprep.subr.mxu0 0.0
      %265 = vmatpush1.msra.mxu0 0.0
      %266 = vmatprep.subr.mxu0 0.0
      %267 = vmatpush1.msra.mxu0 0.0
      %268 = vmatprep.subr.mxu0 0.0
      %269 = vmatpush1.msra.mxu0 0.0
      %270 = vmatprep.subr.mxu0 0.0
      %271 = vmatpush1.msra.mxu0 0.0
      %272 = vmatprep.subr.mxu0 0.0
      %273 = vmatpush1.msra.mxu0 0.0
      %274 = vmatprep.subr.mxu0 0.0
      %275 = vmatpush1.msra.mxu0 0.0
      %276 = vmatprep.subr.mxu0 0.0
      %277 = vmatpush1.msra.mxu0 0.0
      %278 = vmatprep.subr.mxu0 0.0
      %279 = vmatpush1.msra.mxu0 0.0
      %280 = vmatprep.subr.mxu0 0.0
      %281 = vmatpush1.msra.mxu0 0.0
      %282 = vmatprep.subr.mxu0 0.0
      %283 = vmatpush1.msra.mxu0 0.0
      %284 = vmatprep.subr.mxu0 0.0
      %285 = vmatpush1.msra.mxu0 0.0
      %286 = vmatprep.subr.mxu0 0.0
      %287 = vmatpush1.msra.mxu0 0.0
      %288 = vmatprep.subr.mxu0 0.0
      %289 = vmatpush1.msra.mxu0 0.0
      %290 = vmatprep.subr.mxu0 0.0
      %291 = vmatpush1.msra.mxu0 0.0
      %292 = vmatprep.subr.mxu0 0.0
      %293 = vmatpush1.msra.mxu0 0.0
      %294 = vmatprep.subr.mxu0 0.0
      %295 = vmatpush1.msra.mxu0 0.0
      %296 = vmatprep.subr.mxu0 0.0
      %297 = vmatpush1.msra.mxu0 0.0
      %298 = vmatprep.mubr.f32.mxu0 0.0
      %299 = vmatmul.mubr.f32.gmra.mrb[0].mxu0 %v225
      %v300 = vpop.f32.mrb[0].mxu0
      %v301 = vadd.f32 0.0, %v300
      %v302 = vpop.f32.mrb[0].mxu0
      %303 = vmatprep.mubr.f32.mxu0 0.0
      %304 = vmatmul.mubr.f32.gmra.mrb[0].mxu0 %v228
      %v305 = vpop.f32.mrb[0].mxu0
      %v306 = vadd.f32 0.0, %v305
      %v307 = vpop.f32.mrb[0].mxu0
      %308 = vdwg.mxu0
      %v309 = vld [vmem:[%s200] sm:$0xff]
      %v310 = vld [vmem:[%s200 + $0x8] sm:$0xff]
      %v311 = vld [vmem:[%s200 + $0x10] sm:$0xff]
      %vm312 = vcmask 195584
      %v314 = vsel %vm312, %v301, 0
      %v317 = vsel %vm312, %v306, 0
      %319 = vmatprep.subr.mxu0 0.0
      %320 = vmatpush1.msra.mxu0 %v309
      %321 = vmatprep.subr.mxu0 0.0
      %322 = vmatpush1.msra.mxu0 %v310
      %323 = vmatprep.subr.mxu0 0.0
      %324 = vmatpush1.msra.mxu0 %v311
      %325 = vmatprep.subr.mxu0 0.0
      %326 = vmatpush1.msra.mxu0 0.0
      %327 = vmatprep.subr.mxu0 0.0
      %328 = vmatpush1.msra.mxu0 0.0
      %329 = vmatprep.subr.mxu0 0.0
      %330 = vmatpush1.msra.mxu0 0.0
      %331 = vmatprep.subr.mxu0 0.0
      %332 = vmatpush1.msra.mxu0 0.0
      %333 = vmatprep.subr.mxu0 0.0
      %334 = vmatpush1.msra.mxu0 0.0
      %335 = vmatprep.subr.mxu0 0.0
      %336 = vmatpush1.msra.mxu0 0.0
      %337 = vmatprep.subr.mxu0 0.0
      %338 = vmatpush1.msra.mxu0 0.0
      %339 = vmatprep.subr.mxu0 0.0
      %340 = vmatpush1.msra.mxu0 0.0
      %341 = vmatprep.subr.mxu0 0.0
      %342 = vmatpush1.msra.mxu0 0.0
      %343 = vmatprep.subr.mxu0 0.0
      %344 = vmatpush1.msra.mxu0 0.0
      %345 = vmatprep.subr.mxu0 0.0
      %346 = vmatpush1.msra.mxu0 0.0
      %347 = vmatprep.subr.mxu0 0.0
      %348 = vmatpush1.msra.mxu0 0.0
      %349 = vmatprep.subr.mxu0 0.0
      %350 = vmatpush1.msra.mxu0 0.0
      %351 = vmatprep.subr.mxu0 0.0
      %352 = vmatpush1.msra.mxu0 0.0
      %353 = vmatprep.subr.mxu0 0.0
      %354 = vmatpush1.msra.mxu0 0.0
      %355 = vmatprep.subr.mxu0 0.0
      %356 = vmatpush1.msra.mxu0 0.0
      %357 = vmatprep.subr.mxu0 0.0
      %358 = vmatpush1.msra.mxu0 0.0
      %359 = vmatprep.subr.mxu0 0.0
      %360 = vmatpush1.msra.mxu0 0.0
      %361 = vmatprep.subr.mxu0 0.0
      %362 = vmatpush1.msra.mxu0 0.0
      %363 = vmatprep.subr.mxu0 0.0
      %364 = vmatpush1.msra.mxu0 0.0
      %365 = vmatprep.subr.mxu0 0.0
      %366 = vmatpush1.msra.mxu0 0.0
      %367 = vmatprep.subr.mxu0 0.0
      %368 = vmatpush1.msra.mxu0 0.0
      %369 = vmatprep.subr.mxu0 0.0
      %370 = vmatpush1.msra.mxu0 0.0
      %371 = vmatprep.subr.mxu0 0.0
      %372 = vmatpush1.msra.mxu0 0.0
      %373 = vmatprep.subr.mxu0 0.0
      %374 = vmatpush1.msra.mxu0 0.0
      %375 = vmatprep.subr.mxu0 0.0
      %376 = vmatpush1.msra.mxu0 0.0
      %377 = vmatprep.subr.mxu0 0.0
      %378 = vmatpush1.msra.mxu0 0.0
      %379 = vmatprep.subr.mxu0 0.0
      %380 = vmatpush1.msra.mxu0 0.0
      %381 = vmatprep.subr.mxu0 0.0
      %382 = vmatpush1.msra.mxu0 0.0
      %383 = vmatprep.mubr.f32.mxu0 0.0
      %384 = vmatmul.mubr.f32.gmra.mrb[0].mxu0 %v314
      %v385 = vpop.f32.mrb[0].mxu0
      %v386 = vadd.f32 0.0, %v385
      %v387 = vpop.f32.mrb[0].mxu0
      %388 = vmatprep.mubr.f32.mxu0 0.0
      %389 = vmatmul.mubr.f32.gmra.mrb[0].mxu0 %v317
      %v390 = vpop.f32.mrb[0].mxu0
      %v391 = vadd.f32 0.0, %v390
      %v392 = vpop.f32.mrb[0].mxu0
      %393 = vdwg.mxu0
      %v394 = vmul.f32 %v386, %v219
      %v395 = vmul.f32 %v391, %v220
      %396 = vst.msk [vmem:[%s210] sm:$0xff] %vm312, %v394
      %vm397 = vcmask 191488
      %398 = vst.msk [vmem:[%s210 + $0x8] sm:$0xf] %vm397, %v395
      %p399 = scmp.lt.s32.totalorder %s14, 3
      %s400 = scalar_select %p399, %s14, 3
      %s401 = smul.addr %s400, 2
      %s402 = smul.addr %s401, 8
      %s403 = scalar_lea.vmem %s3, %s402
      // Predicated region
      $region33: #{tpu_custom_call.1} parent=31 // pred_check
        %p404 = pneg %p110
      $region34: #{tpu_custom_call.1} parent=31 // pred_check_branch
        %406 = sbr.rel (%p404) target = $region36
      $region35: #{tpu_custom_call.1} parent=31 // pred_region
        _
      $region36: #{tpu_custom_call.1} parent=31 // pred_fallthru
        _
    $region32: #{tpu_custom_call.1} parent=5 // pred_fallthru
      _
    %p407 = scmp.le.s32.totalorder 2, %s9
    // Predicated region
    $region37: #{tpu_custom_call.1} parent=5 // pred_check
      %p408 = pneg %p407
    $region38: #{tpu_custom_call.1} parent=5 // pred_check_branch
      %410 = sbr.rel (%p408) target = $region40
    $region39: #{tpu_custom_call.1} parent=5 // pred_region
      %s411 = ssub.s32 %s9, 2
      // Predicated region
      $region41: #{tpu_custom_call.1} parent=39 // pred_check
        %p412 = pneg %p116
      $region42: #{tpu_custom_call.1} parent=39 // pred_check_branch
        %414 = sbr.rel (%p412) target = $region44
      $region43: #{tpu_custom_call.1} parent=39 // pred_region
        %p415 = scmp.lt.s32.totalorder %s15, 3
        %s416 = scalar_select %p415, %s15, 3
        %s417 = smul.addr %s416, 2
        %s418 = smul.addr %s417, 8
        %s419 = scalar_lea.vmem %s3, %s418
      $region44: #{tpu_custom_call.1} parent=39 // pred_fallthru
        _
    $region40: #{tpu_custom_call.1} parent=5 // pred_fallthru
      _
  $region6: #{tpu_custom_call.1} parent=0 // loop_footer
    %s13 = sadd.s32 1, %s9
  $region7: #{tpu_custom_call.1} parent=0 // loop_footer_branch
    %8 = sbr.rel target = $region3
  $region8: #{tpu_custom_call.1} parent=0 // loop_exit
    _

</llo_original>
